<compile_context>
chip_gen: v6e
topology: v6e:2x2x1
jax: 0.10.0
libtpu: 0.0.40
codegen_flags: <defaults>
</compile_context>

<pallas_src>
import functools
import numpy as np
import jax
import jax.numpy as jnp
from jax.experimental import pallas as pl
from jax.experimental.pallas import tpu as pltpu

_GN_EPS = 1e-5
_NUM_GROUPS = 8
_L2_EPS = 1e-12
_ACT_DTYPE = jnp.bfloat16        # inter-kernel activation storage dtype


# ----------------------------------------------------------------------------
# Glue (plain JAX): PPF feature construction, mirrors RPMNet sample_and_group_multi
# and getGlobalPPFFeat.
# ----------------------------------------------------------------------------
def _angle(v1, v2):
    cross = jnp.stack(
        [
            v1[..., 1] * v2[..., 2] - v1[..., 2] * v2[..., 1],
            v1[..., 2] * v2[..., 0] - v1[..., 0] * v2[..., 2],
            v1[..., 0] * v2[..., 1] - v1[..., 1] * v2[..., 0],
        ],
        axis=-1,
    )
    cross_norm = jnp.linalg.norm(cross, axis=-1)
    dot = jnp.sum(v1 * v2, axis=-1)
    return jnp.arctan2(cross_norm, dot)


def _square_distance(src, dst):
    return (
        jnp.sum(src ** 2, -1)[:, :, None]
        + jnp.sum(dst ** 2, -1)[:, None, :]
        - 2.0 * jnp.einsum("bsc,bnc->bsn", src, dst)
    )


def _query_ball_point(radius, nsample, xyz, new_xyz):
    B, N, _ = xyz.shape
    S = new_xyz.shape[1]
    sqrdists = _square_distance(new_xyz, xyz)
    group_idx = jnp.broadcast_to(
        jnp.arange(N, dtype=jnp.int32)[None, None, :], (B, S, N)
    )
    group_idx = jnp.where(sqrdists > radius ** 2, jnp.int32(N), group_idx)
    group_idx = jnp.sort(group_idx, axis=-1)[:, :, :nsample]
    group_first = group_idx[:, :, :1]
    group_idx = jnp.where(group_idx == N, group_first, group_idx)
    return group_idx


def _index_points(points, idx):
    return jax.vmap(lambda p, i: p[i])(points, idx)


def get_local_ppf_feat(radius, n_sample, xyz, normals):
    """sample_and_group_multi(npoint=-1, ...)['ppf'] -> (B, N, n_sample, 4)."""
    idx = _query_ball_point(radius, n_sample, xyz, xyz)
    grouped_xyz = _index_points(xyz, idx)              # (B, N, K, 3)
    d = grouped_xyz - xyz[:, :, None, :]               # p_r - p_i
    ni = _index_points(normals, idx)
    nr = normals[:, :, None, :]
    nr_d = _angle(nr, d)
    ni_d = _angle(ni, d)
    nr_ni = _angle(nr, ni)
    d_norm = jnp.linalg.norm(d, axis=-1)
    return jnp.stack([nr_d, ni_d, nr_ni, d_norm], axis=-1)


def get_global_ppf_feat(xyz, normals):
    """getGlobalPPFFeat -> (B, N, N, 4)."""
    d = xyz[:, :, None, :] - xyz[:, None, :, :]        # d[b,i,j] = xyz[i]-xyz[j]
    ni = normals[:, :, None, :]
    nj = normals[:, None, :, :]
    ni_d = _angle(ni, d)
    nj_d = _angle(nj, d)
    ni_nj = _angle(ni, nj)
    d_norm = jnp.linalg.norm(d, axis=-1)
    return jnp.stack([ni_d, nj_d, ni_nj, d_norm], axis=-1)


# ----------------------------------------------------------------------------
# Tiling helpers / parameter padding (channels padded to lane multiples of 128).
# ----------------------------------------------------------------------------
def _round_up(x, m):
    return ((x + m - 1) // m) * m


def _stream_budget_bytes():
    # Conservative budget for the double-buffered streaming blocks of one kernel.
    # v7x has the smallest VMEM (64 MiB physical / 32 MiB default scoped) and v5e's
    # default scoped limit is 16 MiB; 8 MiB of streaming buffers fits every gen.
    try:
        cap = int(getattr(pltpu.get_tpu_info(), "vmem_capacity_bytes"))
    except Exception:
        cap = 64 * 1024 * 1024
    return int(min(cap // 8, 8 * 1024 * 1024))


def _pick_row_tile(total_rows, in_row_bytes, out_row_bytes):
    per_row = (in_row_bytes + out_row_bytes) * 2        # in + out, double-buffered
    tp = _stream_budget_bytes() // max(per_row, 1)
    tp = int(max(8, min(tp, 2048)))                     # >=512 rows ~ HBM roofline
    if tp >= total_rows:
        return total_rows                               # full extent is always legal
    return max(8, (tp // 8) * 8)                        # sublane-aligned tile


def _pad_weight(w, rows_p, cols_p):
    r, c = w.shape
    wp = jnp.zeros((rows_p, cols_p), jnp.float32).at[:r, :c].set(w)
    return wp.astype(jnp.bfloat16)                      # MXU operands in bf16


def _pad_vec(v, cols_p):
    v = jnp.asarray(v, jnp.float32).reshape(1, -1)
    c = v.shape[1]
    return jnp.zeros((1, cols_p), jnp.float32).at[:, :c].set(v)


def _fold_gn(sums, count, c_real, c_pad, gamma_p, beta_p):
    """Fold per-channel [sum, sum_sq] (over `count` rows) into per-sample
    per-channel GroupNorm scale/shift (gamma/beta fused).  Tiny plain-JAX op."""
    Bn = sums.shape[0]
    cg = c_real // _NUM_GROUPS
    n = float(count * cg)
    s = sums[:, 0, :c_real].reshape(Bn, _NUM_GROUPS, cg).sum(-1)
    ss = sums[:, 1, :c_real].reshape(Bn, _NUM_GROUPS, cg).sum(-1)
    mean = s / n
    var = jnp.maximum(ss / n - mean * mean, 0.0)        # biased var (GroupNorm)
    inv = jax.lax.rsqrt(var + _GN_EPS)
    mean_c = jnp.repeat(mean, cg, axis=-1)              # (B, c_real)
    inv_c = jnp.repeat(inv, cg, axis=-1)
    pad = c_pad - c_real
    if pad:
        mean_c = jnp.pad(mean_c, ((0, 0), (0, pad)))
        inv_c = jnp.pad(inv_c, ((0, 0), (0, pad)))
    scale = inv_c * gamma_p                              # pad channels -> 0
    shift = beta_p - mean_c * scale                      # pad channels -> 0
    return scale[:, None, :], shift[:, None, :]          # (B, 1, c_pad)


# ----------------------------------------------------------------------------
# Pallas kernels
# ----------------------------------------------------------------------------
def _row_kernel(*refs, apply_gn, do_stats, do_l2, total_rows, block_rows):
    """[GN-apply + ReLU] -> 1x1 conv (channel matmul) [-> L2 normalize] on one row
    tile; optionally accumulates per-channel sum / sum_sq (f32) for the next GN."""
    i = 0
    x_ref = refs[i]; i += 1
    if apply_gn:
        scale_ref = refs[i]; shift_ref = refs[i + 1]; i += 2
    w_ref = refs[i]; b_ref = refs[i + 1]; i += 2
    y_ref = refs[i]; i += 1
    if do_stats:
        sums_ref = refs[i]; i += 1

    t = pl.program_id(1)
    x = x_ref[0].astype(jnp.float32)                          # (TP, Cin)
    if apply_gn:
        x = jnp.maximum(x * scale_ref[0] + shift_ref[0], 0.0)

    y = jnp.dot(x.astype(jnp.bfloat16), w_ref[...],
                preferred_element_type=jnp.float32) + b_ref[...]

    if do_l2:
        inv = jax.lax.rsqrt(jnp.sum(y * y, axis=-1, keepdims=True) + _L2_EPS)
        y = y * inv

    y_ref[0] = y.astype(y_ref.dtype)

    if do_stats:
        @pl.when(t == 0)
        def _init():
            sums_ref[...] = jnp.zeros_like(sums_ref)
        rid = jax.lax.broadcasted_iota(jnp.int32, (block_rows, 1), 0) + t * block_rows
        ym = jnp.where(rid < total_rows, y, 0.0)              # mask edge-padded rows
        both = jnp.concatenate(
            [jnp.sum(ym, axis=0, keepdims=True),
             jnp.sum(ym * ym, axis=0, keepdims=True)], axis=0)  # (2, Cout) f32
        sums_ref[0] = sums_ref[0] + both


def _max_conv_kernel(x_ref, scale_ref, shift_ref, w_ref, b_ref, y_ref, sums_ref,
                     hm_ref, *, n_points, k_total, block_points, block_k):
    """GN-apply + ReLU + running max over the neighbour axis + 1x1 conv + stats."""
    t = pl.program_id(1)
    s = pl.program_id(2)
    nk = pl.num_programs(2)

    x = x_ref[0].astype(jnp.float32)                          # (TN, TK, C)
    x = jnp.maximum(x * scale_ref[0] + shift_ref[0], 0.0)
    kid = jax.lax.broadcasted_iota(jnp.int32, (1, block_k, 1), 1) + s * block_k
    x = jnp.where(kid < k_total, x, -jnp.inf)                 # mask padded neighbours
    tile_max = jnp.max(x, axis=1)                             # (TN, C)

    prev_max = jnp.where(s == 0, jnp.full_like(tile_max, -jnp.inf), hm_ref[...])
    hm_ref[...] = jnp.maximum(prev_max, tile_max)

    @pl.when(s == nk - 1)
    def _finalize():
        y = jnp.dot(hm_ref[...].astype(jnp.bfloat16), w_ref[...],
                    preferred_element_type=jnp.float32) + b_ref[...]
        y_ref[0] = y.astype(y_ref.dtype)
        pid = (jax.lax.broadcasted_iota(jnp.int32, (block_points, 1), 0)
               + t * block_points)
        ym = jnp.where(pid < n_points, y, 0.0)                # mask edge-padded points
        both = jnp.concatenate(
            [jnp.sum(ym, axis=0, keepdims=True),
             jnp.sum(ym * ym, axis=0, keepdims=True)], axis=0)
        prev = jnp.where(t == 0, jnp.zeros_like(both), sums_ref[0])
        sums_ref[0] = prev + both


# ----------------------------------------------------------------------------
# pallas_call wrappers
# ----------------------------------------------------------------------------
def _row_call(x, scale, shift, w, b, *, do_stats, do_l2, out_dtype):
    Bn, P, Cin = x.shape
    Cout = w.shape[1]
    in_row_bytes = Cin * jnp.dtype(x.dtype).itemsize
    out_row_bytes = Cout * jnp.dtype(out_dtype).itemsize
    TP = _pick_row_tile(P, in_row_bytes, out_row_bytes)
    nt = pl.cdiv(P, TP)
    apply_gn = scale is not None

    inputs = [x]
    in_specs = [pl.BlockSpec((1, TP, Cin), lambda b_, t: (b_, t, 0))]
    if apply_gn:
        inputs += [scale, shift]
        in_specs += [pl.BlockSpec((1, 1, Cin), lambda b_, t: (b_, 0, 0)),
                     pl.BlockSpec((1, 1, Cin), lambda b_, t: (b_, 0, 0))]
    inputs += [w, b]
    in_specs += [pl.BlockSpec((Cin, Cout), lambda b_, t: (0, 0)),
                 pl.BlockSpec((1, Cout), lambda b_, t: (0, 0))]

    y_spec = pl.BlockSpec((1, TP, Cout), lambda b_, t: (b_, t, 0))
    if do_stats:
        out_shape = (jax.ShapeDtypeStruct((Bn, P, Cout), out_dtype),
                     jax.ShapeDtypeStruct((Bn, 2, Cout), jnp.float32))
        out_specs = [y_spec,
                     pl.BlockSpec((1, 2, Cout), lambda b_, t: (b_, 0, 0))]
        dims = ("parallel", "arbitrary")
    else:
        out_shape = jax.ShapeDtypeStruct((Bn, P, Cout), out_dtype)
        out_specs = y_spec
        dims = ("parallel", "parallel")

    kernel = functools.partial(_row_kernel, apply_gn=apply_gn, do_stats=do_stats,
                               do_l2=do_l2, total_rows=P, block_rows=TP)
    return pl.pallas_call(
        kernel,
        out_shape=out_shape,
        grid_spec=pltpu.PrefetchScalarGridSpec(
            num_scalar_prefetch=0, grid=(Bn, nt),
            in_specs=in_specs, out_specs=out_specs),
        compiler_params=pltpu.CompilerParams(dimension_semantics=dims),
    )(*inputs)


def _max_call(y_prev, scale, shift, w, b, n_points, k_total, *, out_dtype):
    Bn = y_prev.shape[0]
    C = y_prev.shape[-1]
    Cout = w.shape[1]
    x4 = y_prev.reshape(Bn, n_points, k_total, C)   # free reshape (row-major split)

    budget = _stream_budget_bytes()
    act_b = jnp.dtype(y_prev.dtype).itemsize
    out_b = jnp.dtype(out_dtype).itemsize
    TK = k_total if k_total <= 512 else 512         # multiple of 8 or full extent
    per_point = TK * C * act_b * 2 + C * 4 + Cout * out_b * 2
    TN = int(max(8, min(budget // per_point, 1024)))
    if TN >= n_points:
        TN = n_points
    else:
        TN = max(8, (TN // 8) * 8)
    nt = pl.cdiv(n_points, TN)
    nk = pl.cdiv(k_total, TK)

    kernel = functools.partial(_max_conv_kernel, n_points=n_points,
                               k_total=k_total, block_points=TN, block_k=TK)
    return pl.pallas_call(
        kernel,
        out_shape=(jax.ShapeDtypeStruct((Bn, n_points, Cout), out_dtype),
                   jax.ShapeDtypeStruct((Bn, 2, Cout), jnp.float32)),
        grid_spec=pltpu.PrefetchScalarGridSpec(
            num_scalar_prefetch=0, grid=(Bn, nt, nk),
            in_specs=[pl.BlockSpec((1, TN, TK, C), lambda b_, t, s: (b_, t, s, 0)),
                      pl.BlockSpec((1, 1, C), lambda b_, t, s: (b_, 0, 0)),
                      pl.BlockSpec((1, 1, C), lambda b_, t, s: (b_, 0, 0)),
                      pl.BlockSpec((C, Cout), lambda b_, t, s: (0, 0)),
                      pl.BlockSpec((1, Cout), lambda b_, t, s: (0, 0))],
            out_specs=[pl.BlockSpec((1, TN, Cout), lambda b_, t, s: (b_, t, 0)),
                       pl.BlockSpec((1, 2, Cout), lambda b_, t, s: (b_, 0, 0))],
            scratch_shapes=[pltpu.VMEM((TN, C), jnp.float32)]),
        compiler_params=pltpu.CompilerParams(
            dimension_semantics=("parallel", "arbitrary", "arbitrary")),
    )(x4, scale, shift, w, b)


def embeddings_pallas(feat, params, emb_dims):
    """feat: (B, N, K, 4) -> (B, N, Hp) with Hp = round_up(emb_dims, 128).
    Matches prepool -> max over neighbours -> postpool -> L2 normalize."""
    B, N, K, cin = feat.shape
    P = N * K
    H, F = emb_dims, 2 * emb_dims
    Hp, Fp = _round_up(H, 128), _round_up(F, 128)

    (w1, b1, g1, e1, w2, b2, g2, e2, w3, b3, g3, e3,
     w4, b4, g4, e4, w5, b5, g5, e5, w6, b6) = params

    W1, B1 = _pad_weight(w1, cin, Hp), _pad_vec(b1, Hp)
    G1, E1 = _pad_vec(g1, Hp), _pad_vec(e1, Hp)
    W2, B2 = _pad_weight(w2, Hp, Hp), _pad_vec(b2, Hp)
    G2, E2 = _pad_vec(g2, Hp), _pad_vec(e2, Hp)
    W3, B3 = _pad_weight(w3, Hp, Fp), _pad_vec(b3, Fp)
    G3, E3 = _pad_vec(g3, Fp), _pad_vec(e3, Fp)
    W4, B4 = _pad_weight(w4, Fp, Fp), _pad_vec(b4, Fp)
    G4, E4 = _pad_vec(g4, Fp), _pad_vec(e4, Fp)
    W5, B5 = _pad_weight(w5, Fp, Hp), _pad_vec(b5, Hp)
    G5, E5 = _pad_vec(g5, Hp), _pad_vec(e5, Hp)
    W6, B6 = _pad_weight(w6, Hp, Hp), _pad_vec(b6, Hp)

    x = feat.reshape(B, P, cin)            # rows p = n*K + k (no transpose copy)
    act = _ACT_DTYPE                       # bf16 inter-kernel activations

    # prepool: conv + two-pass GroupNorm (stats fused into each conv kernel)
    y1, s1 = _row_call(x, None, None, W1, B1, do_stats=True, do_l2=False,
                       out_dtype=act)
    sc1, sh1 = _fold_gn(s1, P, H, Hp, G1, E1)
    y2, s2 = _row_call(y1, sc1, sh1, W2, B2, do_stats=True, do_l2=False,
                       out_dtype=act)
    sc2, sh2 = _fold_gn(s2, P, H, Hp, G2, E2)
    y3, s3 = _row_call(y2, sc2, sh2, W3, B3, do_stats=True, do_l2=False,
                       out_dtype=act)
    sc3, sh3 = _fold_gn(s3, P, F, Fp, G3, E3)

    # GN3-apply + ReLU + max over neighbours + conv4 (fused, running-max scratch)
    y4, s4 = _max_call(y3, sc3, sh3, W4, B4, N, K, out_dtype=act)
    sc4, sh4 = _fold_gn(s4, N, F, Fp, G4, E4)

    # postpool
    y5, s5 = _row_call(y4, sc4, sh4, W5, B5, do_stats=True, do_l2=False,
                       out_dtype=act)
    sc5, sh5 = _fold_gn(s5, N, H, Hp, G5, E5)
    y6 = _row_call(y5, sc5, sh5, W6, B6, do_stats=False, do_l2=True,
                   out_dtype=jnp.float32)
    return y6                               # (B, N, Hp); padded channels are zero


# ----------------------------------------------------------------------------
# Parameter init (deterministic, synthetic) and full forward
# ----------------------------------------------------------------------------
def init_embedding_params(key, emb_dims, in_dim=4):
    half, full = emb_dims, emb_dims * 2

    def conv(k, cin, cout):
        kw, kb = jax.random.split(k)
        w = jax.random.normal(kw, (cin, cout), jnp.float32) / np.sqrt(cin)
        b = 0.1 * jax.random.normal(kb, (1, cout), jnp.float32)
        return w, b

    def gn(k, c):
        kg, kb = jax.random.split(k)
        return (1.0 + 0.1 * jax.random.normal(kg, (1, c), jnp.float32),
                0.1 * jax.random.normal(kb, (1, c), jnp.float32))

    keys = jax.random.split(key, 11)
    params = []
    # prepool: Conv(4,half)+GN ; Conv(half,half)+GN ; Conv(half,full)+GN
    params += [*conv(keys[0], in_dim, half), *gn(keys[1], half)]
    params += [*conv(keys[2], half, half), *gn(keys[3], half)]
    params += [*conv(keys[4], half, full), *gn(keys[5], full)]
    # postpool: Conv(full,full)+GN ; Conv(full,half)+GN ; Conv(half,half)
    params += [*conv(keys[6], full, full), *gn(keys[7], full)]
    params += [*conv(keys[8], full, half), *gn(keys[9], half)]
    params += [*conv(keys[10], half, half)]
    return params


def ppf_local_global_net(xyz, normals, params_local, params_global,
                         emb_dims, radius, n_sample, use_global):
    # TODO(synk): compute_normal() uses open3d KD-tree normal estimation; no Pallas
    # equivalent, so normals are taken as an explicit input.
    local_ppf = get_local_ppf_feat(radius, n_sample, xyz, normals)     # (B, N, K, 4)
    local_emb = embeddings_pallas(local_ppf, params_local, emb_dims)
    if use_global:
        global_ppf = get_global_ppf_feat(xyz, normals)                 # (B, N, N, 4)
        global_emb = embeddings_pallas(global_ppf, params_global, emb_dims)
        emb = local_emb + global_emb
    else:
        emb = local_emb
    return emb[:, :, :emb_dims]            # slice off the channel padding


if __name__ == "__main__":
    key = jax.random.PRNGKey(0)
    B, N = 2, 16
    emb_dims = 32          # small but divisible by 8 (GroupNorm groups)
    n_sample = 8           # num_neighbors
    radius = 0.3
    use_global = True      # exercise both local and global branches

    k_xyz, k_nrm, k_pl, k_pg = jax.random.split(key, 4)
    xyz = jax.random.uniform(k_xyz, (B, N, 3), dtype=jnp.float32)
    normals = jax.random.normal(k_nrm, (B, N, 3), dtype=jnp.float32)
    normals = normals / jnp.linalg.norm(normals, axis=-1, keepdims=True)

    params_local = init_embedding_params(k_pl, emb_dims)
    params_global = init_embedding_params(k_pg, emb_dims)

    out = ppf_local_global_net(xyz, normals, params_local, params_global,
                               emb_dims=emb_dims, radius=radius,
                               n_sample=n_sample, use_global=use_global)
    out = jax.block_until_ready(out)

    assert out.shape == (B, N, emb_dims), out.shape
    assert bool(jnp.all(jnp.isfinite(out)))
    print("KERNEL_OK")
</pallas_src>

<mosaic_0001>
module attributes {stable_mosaic.version = 11 : i64} {
  func.func @_row_kernel(%arg0: i32, %arg1: i32, %arg2: memref<1x128x4xf32, #tpu.memory_space<vmem>>, %arg3: memref<4x128xbf16, #tpu.memory_space<vmem>>, %arg4: memref<1x128xf32, #tpu.memory_space<vmem>>, %arg5: memref<1x128x128xbf16, #tpu.memory_space<vmem>>, %arg6: memref<1x2x128xf32, #tpu.memory_space<vmem>>) attributes {dimension_semantics = [#tpu.dimension_semantics<parallel>, #tpu.dimension_semantics<arbitrary>], iteration_bounds = array<i64: 2, 1>, scalar_prefetch = 0 : i64, scratch_operands = 0 : i64, tpu.core_type = #tpu.core_type<tc>, window_params = [{transform_indices = @transform_0, window_bounds = array<i64: 1, 128, 4>}, {pipeline_mode = #tpu.pipeline_mode<synchronous>, transform_indices = @transform_1, window_bounds = array<i64: 4, 128>}, {pipeline_mode = #tpu.pipeline_mode<synchronous>, transform_indices = @transform_2, window_bounds = array<i64: 1, 128>}, {transform_indices = @transform_3, window_bounds = array<i64: 1, 128, 128>}, {transform_indices = @transform_4, window_bounds = array<i64: 1, 2, 128>}]} {
    %c0 = arith.constant 0 : index
    %c0_0 = arith.constant 0 : index
    %c0_1 = arith.constant 0 : index
    %0 = vector.load %arg2[%c0, %c0_0, %c0_1] : memref<1x128x4xf32, #tpu.memory_space<vmem>>, vector<1x128x4xf32>
    %1 = vector.shape_cast %0 : vector<1x128x4xf32> to vector<128x4xf32>
    %2 = arith.truncf %1 : vector<128x4xf32> to vector<128x4xbf16>
    %c0_2 = arith.constant 0 : index
    %c0_3 = arith.constant 0 : index
    %3 = vector.load %arg3[%c0_2, %c0_3] : memref<4x128xbf16, #tpu.memory_space<vmem>>, vector<4x128xbf16>
    %cst = arith.constant dense<0.000000e+00> : vector<128x128xf32>
    %4 = tpu.matmul %2, %3, %cst {dimension_numbers = #tpu.dot_dimension_numbers<[1], [0], [0], [1], [0, 0, 1, 1], [], []>} : vector<128x4xbf16>, vector<4x128xbf16>, vector<128x128xf32> -> vector<128x128xf32>
    %c0_4 = arith.constant 0 : index
    %c0_5 = arith.constant 0 : index
    %5 = vector.load %arg4[%c0_4, %c0_5] : memref<1x128xf32, #tpu.memory_space<vmem>>, vector<1x128xf32>
    %6 = vector.broadcast %5 : vector<1x128xf32> to vector<128x128xf32>
    %7 = arith.addf %4, %6 : vector<128x128xf32>
    %8 = arith.truncf %7 : vector<128x128xf32> to vector<128x128xbf16>
    %c0_6 = arith.constant 0 : index
    %c0_7 = arith.constant 0 : index
    %c0_8 = arith.constant 0 : index
    %9 = vector.load %arg5[%c0_6, %c0_7, %c0_8] : memref<1x128x128xbf16, #tpu.memory_space<vmem>>, vector<1x128x128xbf16>
    %10 = vector.shape_cast %9 : vector<1x128x128xbf16> to vector<128x128xbf16>
    %11 = vector.shape_cast %8 : vector<128x128xbf16> to vector<1x128x128xbf16>
    tpu.vector_store %arg5[%c0_6, %c0_7, %c0_8], %11 {strides = array<i32>} : memref<1x128x128xbf16, #tpu.memory_space<vmem>>, vector<1x128x128xbf16>,
    %c0_i32 = arith.constant 0 : i32
    %12 = arith.cmpi eq, %arg1, %c0_i32 : i32
    %13 = arith.extui %12 : i1 to i32
    %c0_i32_9 = arith.constant 0 : i32
    %14 = arith.cmpi ne, %13, %c0_i32_9 : i32
    scf.if %14 {
      %cst_20 = arith.constant 0.000000e+00 : f32
      %37 = vector.broadcast %cst_20 : f32 to vector<1x2x128xf32>
      %c0_21 = arith.constant 0 : index
      %c0_22 = arith.constant 0 : index
      %c0_23 = arith.constant 0 : index
      %38 = vector.load %arg6[%c0_21, %c0_22, %c0_23] : memref<1x2x128xf32, #tpu.memory_space<vmem>>, vector<1x2x128xf32>
      tpu.vector_store %arg6[%c0_21, %c0_22, %c0_23], %37 {strides = array<i32>} : memref<1x2x128xf32, #tpu.memory_space<vmem>>, vector<1x2x128xf32>,
    } else {
    }
    %15 = tpu.iota {dimensions = array<i32: 0>} : vector<128x1xi32>
    %c128_i32 = arith.constant 128 : i32
    %16 = arith.muli %arg1, %c128_i32 : i32
    %17 = vector.broadcast %16 : i32 to vector<128x1xi32>
    %18 = arith.addi %15, %17 : vector<128x1xi32>
    %c128_i32_10 = arith.constant 128 : i32
    %19 = vector.broadcast %c128_i32_10 : i32 to vector<128x1xi32>
    %20 = arith.cmpi slt, %18, %19 : vector<128x1xi32>
    %cst_11 = arith.constant 0.000000e+00 : f32
    %21 = vector.shape_cast %20 : vector<128x1xi1> to vector<128x1xi1>
    %22 = vector.broadcast %21 : vector<128x1xi1> to vector<128x128xi1>
    %23 = vector.broadcast %cst_11 : f32 to vector<128x128xf32>
    %24 = arith.select %22, %7, %23 : vector<128x128xi1>, vector<128x128xf32>
    %cst_12 = arith.constant dense<0.000000e+00> : vector<128xf32>
    %25 = vector.multi_reduction <add>, %24, %cst_12 [0] : vector<128x128xf32> to vector<128xf32>
    %26 = vector.shape_cast %25 : vector<128xf32> to vector<1x128xf32>
    %27 = arith.mulf %24, %24 : vector<128x128xf32>
    %cst_13 = arith.constant dense<0.000000e+00> : vector<128xf32>
    %28 = vector.multi_reduction <add>, %27, %cst_13 [0] : vector<128x128xf32> to vector<128xf32>
    %29 = vector.shape_cast %28 : vector<128xf32> to vector<1x128xf32>
    %30 = tpu.concatenate %26, %29 in 0 : vector<1x128xf32>, vector<1x128xf32> -> vector<2x128xf32>
    %c0_14 = arith.constant 0 : index
    %c0_15 = arith.constant 0 : index
    %c0_16 = arith.constant 0 : index
    %31 = vector.load %arg6[%c0_14, %c0_15, %c0_16] : memref<1x2x128xf32, #tpu.memory_space<vmem>>, vector<1x2x128xf32>
    %32 = vector.shape_cast %31 : vector<1x2x128xf32> to vector<2x128xf32>
    %33 = arith.addf %32, %30 : vector<2x128xf32>
    %c0_17 = arith.constant 0 : index
    %c0_18 = arith.constant 0 : index
    %c0_19 = arith.constant 0 : index
    %34 = vector.load %arg6[%c0_17, %c0_18, %c0_19] : memref<1x2x128xf32, #tpu.memory_space<vmem>>, vector<1x2x128xf32>
    %35 = vector.shape_cast %34 : vector<1x2x128xf32> to vector<2x128xf32>
    %36 = vector.shape_cast %33 : vector<2x128xf32> to vector<1x2x128xf32>
    tpu.vector_store %arg6[%c0_17, %c0_18, %c0_19], %36 {strides = array<i32>} : memref<1x2x128xf32, #tpu.memory_space<vmem>>, vector<1x2x128xf32>,
    return
  }
  func.func @transform_0(%arg0: i32, %arg1: i32) -> (i32, i32, i32) {
    %c0_i32 = arith.constant 0 : i32
    %c0_i32_0 = arith.constant 0 : i32
    return %arg0, %arg1, %c0_i32 : i32, i32, i32
  }
  func.func @transform_1(%arg0: i32, %arg1: i32) -> (i32, i32) {
    %c0_i32 = arith.constant 0 : i32
    %c0_i32_0 = arith.constant 0 : i32
    %c0_i32_1 = arith.constant 0 : i32
    return %c0_i32, %c0_i32_0 : i32, i32
  }
  func.func @transform_2(%arg0: i32, %arg1: i32) -> (i32, i32) {
    %c0_i32 = arith.constant 0 : i32
    %c0_i32_0 = arith.constant 0 : i32
    %c0_i32_1 = arith.constant 0 : i32
    return %c0_i32, %c0_i32_0 : i32, i32
  }
  func.func @transform_3(%arg0: i32, %arg1: i32) -> (i32, i32, i32) {
    %c0_i32 = arith.constant 0 : i32
    %c0_i32_0 = arith.constant 0 : i32
    return %arg0, %arg1, %c0_i32 : i32, i32, i32
  }
  func.func @transform_4(%arg0: i32, %arg1: i32) -> (i32, i32, i32) {
    %c0_i32 = arith.constant 0 : i32
    %c0_i32_0 = arith.constant 0 : i32
    %c0_i32_1 = arith.constant 0 : i32
    return %arg0, %c0_i32, %c0_i32_0 : i32, i32, i32
  }
}

</mosaic_0001>

<llo_original>
// kernel: tpu_custom_call.1
$region0: #{tpu_custom_call.1}
  #allocation0 [shape = 'u32[]', space=smem, size = 0x4, offset = 0x4, fixed_abs, tag = 'smem constant byte address 0x4 - core index']
  #allocation1 [shape = 'u32[144,128]{1,0:T(1,128)}', space=vmem, size = 0x12000, scoped, tag = 'internal scratch']
  %s0 = inlined_call_operand.vmem [shape: f32[2,128,4], index: 0, kind: input, shape index: {}]
  %s1 = inlined_call_operand.vmem [shape: bf16[4,128], index: 1, kind: input, shape index: {}]
  %s2 = inlined_call_operand.vmem [shape: f32[1,128], index: 2, kind: input, shape index: {}]
  %s3 = inlined_call_operand.hbm [shape: bf16[2,128,128], index: 3, kind: output, shape index: {0}]
  %s4 = inlined_call_operand.hbm [shape: f32[2,2,128], index: 4, kind: output, shape index: {1}]
  %5 = xla_tuple %s3, %s4
  %s6 = sld [smem:[#allocation0]]
  $region57: #{tpu_custom_call.1} parent=0
    _
  %s8 = ssub.s32 1, %s6
  %s9 = scalar_select 0, %s8, %s6
  $region1: #{tpu_custom_call.1} parent=0
    #allocation2 [shape = 'u8[65536]{0}', space=vmem, size = 0x10000, scoped, tag = 'output window, operand 0']
    #allocation3 [shape = 's32[2]{0}', space=sflag, size = 0x8, scoped, tag = 'scoped memory for tpu_custom_call.1']
    #allocation4 [shape = 'u8[2048]{0}', space=vmem, size = 0x800, scoped, tag = 'output window, operand 1']
    #allocation5 [shape = 's32[2]{0}', space=sflag, size = 0x8, scoped, tag = 'scoped memory for tpu_custom_call.1']
    %10 = vsyncpa [#allocation3], 0
    %s11 = scalar_lea.sflag [#allocation3], 1
    %12 = vsyncpa %s11, 0
    %13 = vsyncpa [#allocation5], 0
    %s14 = scalar_lea.sflag [#allocation5], 1
    %15 = vsyncpa %s14, 0
    loop: start=0, step=1, limit=4
    $region2: #{tpu_custom_call.1} parent=1 // loop_pre_header
      _
    $region3: #{tpu_custom_call.1} parent=1 // loop_header
      %s17 = sphi 0, %s21
      %p18 = scmp.ge.s32.totalorder %s17, 4
      %s24 = sphi 0, %s36
      %s25 = sphi 0, %s32
      %s26 = sphi 0, %s24
      %s27 = sphi 0, %s25
      %s28 = sphi 0, %s26
      %s29 = sphi 0, %s27
      %s41 = sphi 0, %s43
      %s44 = sphi 0, %s41
      %s45 = sphi 0, %s44
      %s61 = sphi 0, %s45
      %s65 = sphi 0, %s65
      %s67 = sphi 0, %s65
      %s68 = sphi 0, %s67
      %s82 = sphi 0, %s68
      %s86 = sphi 0, %s86
      %s88 = sphi 0, %s86
      %s89 = sphi 0, %s88
      %s103 = sphi 0, %s89
      %s111 = sphi 0, %s113
      %s114 = sphi 0, %s111
      %s115 = sphi 0, %s114
      %s131 = sphi 0, %s115
      %s137 = sphi 0, %s139
      %s140 = sphi 0, %s137
      %s141 = sphi 0, %s140
      %s157 = sphi 0, %s141
    $region4: #{tpu_custom_call.1} parent=1 // loop_header_branch
      %20 = sbr.rel (%p18) target = $region8
    $region5: #{tpu_custom_call.1} parent=1 // loop_body
      %s22 = ssub.s32 %s17, 1
      %s23 = ssub.s32 %s17, 2
      %s30 = sadd.s32 1, %s25
      %p31 = scmp.ge.s32.totalorder %s30, 1
      %s32 = scalar_select %p31, 0, %s30
      %s33 = sadd.s32 1, %s24
      %s34 = scalar_select %p31, %s33, %s24
      %p35 = scmp.ge.s32.totalorder %s34, 2
      %s36 = scalar_select %p35, 0, %s34
      %s37 = ssub.s32 %s24, %s36
      %s38 = ssub.s32 %s25, %s32
      %s39 = sor.u32 %s37, %s38
      %p40 = scmp.eq.s32.totalorder %s39, 0
      %s42 = sadd.s32 %s41, 1
      %s43 = scalar_select %p40, %s41, %s42
      %p46 = pneg %p40
      %p47 = scmp.eq.s32.totalorder %s17, 1
      %p48 = por %p46, %p47
      %p49 = scmp.ne.s32.totalorder %s41, %s44
      %p50 = scmp.eq.s32.totalorder %s17, 0
      %p51 = por %p49, %p50
      %p52 = scmp.ne.s32.totalorder %s41, %s44
      %p53 = scmp.eq.s32.totalorder %s22, 1
      %p54 = por %p52, %p53
      %p55 = scmp.ne.s32.totalorder %s44, %s45
      %p56 = scmp.eq.s32.totalorder %s22, 0
      %p57 = por %p55, %p56
      %p58 = scmp.ne.s32.totalorder %s44, %s45
      %p59 = scmp.eq.s32.totalorder %s23, 1
      %p60 = por %p58, %p59
      %p62 = scmp.ne.s32.totalorder %s45, %s61
      %p63 = scmp.eq.s32.totalorder %s23, 0
      %p64 = por %p62, %p63
      %s66 = sadd.s32 %s65, 1
      %p69 = scmp.eq.s32.totalorder %s17, 1
      %p70 = scmp.ne.s32.totalorder %s65, %s67
      %p71 = scmp.eq.s32.totalorder %s17, 0
      %p72 = por %p70, %p71
      %p73 = scmp.ne.s32.totalorder %s65, %s67
      %p74 = scmp.eq.s32.totalorder %s22, 1
      %p75 = por %p73, %p74
      %p76 = scmp.ne.s32.totalorder %s67, %s68
      %p77 = scmp.eq.s32.totalorder %s22, 0
      %p78 = por %p76, %p77
      %p79 = scmp.ne.s32.totalorder %s67, %s68
      %p80 = scmp.eq.s32.totalorder %s23, 1
      %p81 = por %p79, %p80
      %p83 = scmp.ne.s32.totalorder %s68, %s82
      %p84 = scmp.eq.s32.totalorder %s23, 0
      %p85 = por %p83, %p84
      %s87 = sadd.s32 %s86, 1
      %p90 = scmp.eq.s32.totalorder %s17, 1
      %p91 = scmp.ne.s32.totalorder %s86, %s88
      %p92 = scmp.eq.s32.totalorder %s17, 0
      %p93 = por %p91, %p92
      %p94 = scmp.ne.s32.totalorder %s86, %s88
      %p95 = scmp.eq.s32.totalorder %s22, 1
      %p96 = por %p94, %p95
      %p97 = scmp.ne.s32.totalorder %s88, %s89
      %p98 = scmp.eq.s32.totalorder %s22, 0
      %p99 = por %p97, %p98
      %p100 = scmp.ne.s32.totalorder %s88, %s89
      %p101 = scmp.eq.s32.totalorder %s23, 1
      %p102 = por %p100, %p101
      %p104 = scmp.ne.s32.totalorder %s89, %s103
      %p105 = scmp.eq.s32.totalorder %s23, 0
      %p106 = por %p104, %p105
      %s107 = ssub.s32 %s24, %s36
      %s108 = ssub.s32 %s25, %s32
      %s109 = sor.u32 %s107, %s108
      %p110 = scmp.eq.s32.totalorder %s109, 0
      %s112 = sadd.s32 %s111, 1
      %s113 = scalar_select %p110, %s111, %s112
      %p116 = pneg %p110
      %p117 = scmp.eq.s32.totalorder %s17, 1
      %p118 = por %p116, %p117
      %p119 = scmp.ne.s32.totalorder %s111, %s114
      %p120 = scmp.eq.s32.totalorder %s17, 0
      %p121 = por %p119, %p120
      %p122 = scmp.ne.s32.totalorder %s111, %s114
      %p123 = scmp.eq.s32.totalorder %s22, 1
      %p124 = por %p122, %p123
      %p125 = scmp.ne.s32.totalorder %s114, %s115
      %p126 = scmp.eq.s32.totalorder %s22, 0
      %p127 = por %p125, %p126
      %p128 = scmp.ne.s32.totalorder %s114, %s115
      %p129 = scmp.eq.s32.totalorder %s23, 1
      %p130 = por %p128, %p129
      %p132 = scmp.ne.s32.totalorder %s115, %s131
      %p133 = scmp.eq.s32.totalorder %s23, 0
      %p134 = por %p132, %p133
      %s135 = ssub.s32 %s24, %s36
      %p136 = scmp.eq.s32.totalorder %s135, 0
      %s138 = sadd.s32 %s137, 1
      %s139 = scalar_select %p136, %s137, %s138
      %p142 = pneg %p136
      %p143 = scmp.eq.s32.totalorder %s17, 1
      %p144 = por %p142, %p143
      %p145 = scmp.ne.s32.totalorder %s137, %s140
      %p146 = scmp.eq.s32.totalorder %s17, 0
      %p147 = por %p145, %p146
      %p148 = scmp.ne.s32.totalorder %s137, %s140
      %p149 = scmp.eq.s32.totalorder %s22, 1
      %p150 = por %p148, %p149
      %p151 = scmp.ne.s32.totalorder %s140, %s141
      %p152 = scmp.eq.s32.totalorder %s22, 0
      %p153 = por %p151, %p152
      %p154 = scmp.ne.s32.totalorder %s140, %s141
      %p155 = scmp.eq.s32.totalorder %s23, 1
      %p156 = por %p154, %p155
      %p158 = scmp.ne.s32.totalorder %s141, %s157
      %p159 = scmp.eq.s32.totalorder %s23, 0
      %p160 = por %p158, %p159
      %p161 = scmp.le.s32.totalorder 1, %s17
      %p162 = scmp.lt.s32.totalorder %s17, 3
      %p163 = pnand %p161, %p162
      %p164 = pneg %p163
      // Predicated region
      $region9: #{tpu_custom_call.1} parent=5 // pred_check
        _
      $region10: #{tpu_custom_call.1} parent=5 // pred_check_branch
        %166 = sbr.rel (%p163) target = $region12
      $region11: #{tpu_custom_call.1} parent=5 // pred_region
        %s167 = ssub.s32 %s17, 1
        // Predicated region
        $region13: #{tpu_custom_call.1} parent=11 // pred_check
          %p168 = pneg %p78
        $region14: #{tpu_custom_call.1} parent=11 // pred_check_branch
          %170 = sbr.rel (%p168) target = $region16
        $region15: #{tpu_custom_call.1} parent=11 // pred_region
          _
        $region16: #{tpu_custom_call.1} parent=11 // pred_fallthru
          _
        // Predicated region
        $region17: #{tpu_custom_call.1} parent=11 // pred_check
          %p171 = pneg %p99
        $region18: #{tpu_custom_call.1} parent=11 // pred_check_branch
          %173 = sbr.rel (%p171) target = $region20
        $region19: #{tpu_custom_call.1} parent=11 // pred_region
          _
        $region20: #{tpu_custom_call.1} parent=11 // pred_fallthru
          _
      $region12: #{tpu_custom_call.1} parent=5 // pred_fallthru
        _
      %p174 = scmp.lt.s32.totalorder %s17, 2
      // Predicated region
      $region21: #{tpu_custom_call.1} parent=5 // pred_check
        %p175 = pneg %p174
      $region22: #{tpu_custom_call.1} parent=5 // pred_check_branch
        %177 = sbr.rel (%p175) target = $region24
      $region23: #{tpu_custom_call.1} parent=5 // pred_region
        // Predicated region
        $region25: #{tpu_custom_call.1} parent=23 // pred_check
          %p178 = pneg %p51
        $region26: #{tpu_custom_call.1} parent=23 // pred_check_branch
          %180 = sbr.rel (%p178) target = $region28
        $region27: #{tpu_custom_call.1} parent=23 // pred_region
          %s181 = smul.u32 16, %s25
          %p182 = scmp.lt.s32.totalorder %s24, 1
          %s183 = scalar_select %p182, %s24, 1
          %p184 = scmp.lt.s32.totalorder %s181, 15
          %s185 = scalar_select %p184, %s181, 15
          %s186 = smul.addr %s183, 16
          %s187 = sadd.s32 %s185, %s186
          %s188 = smul.addr %s187, 8
          %s189 = scalar_lea.vmem %s0, %s188
          %s190 = smul.u32 16, %s25
        $region28: #{tpu_custom_call.1} parent=23 // pred_fallthru
          _
      $region24: #{tpu_custom_call.1} parent=5 // pred_fallthru
        _
      %p191 = scmp.le.s32.totalorder 1, %s17
      %p192 = scmp.lt.s32.totalorder %s17, 3
      %p193 = pnand %p191, %p192
      %p194 = pneg %p193
      // Predicated region
      $region29: #{tpu_custom_call.1} parent=5 // pred_check
        _
      $region30: #{tpu_custom_call.1} parent=5 // pred_check_branch
        %196 = sbr.rel (%p193) target = $region32
      $region31: #{tpu_custom_call.1} parent=5 // pred_region
        %s197 = ssub.s32 %s17, 1
        %s198 = smul.u32 16, %s27
        %p199 = scmp.lt.s32.totalorder %s26, 1
        %s200 = scalar_select %p199, %s26, 1
        %p201 = scmp.lt.s32.totalorder %s198, 15
        %s202 = scalar_select %p201, %s198, 15
        %s203 = smul.addr %s200, 16
        %s204 = sadd.s32 %s202, %s203
        %s205 = smul.addr %s204, 8
        %s206 = scalar_lea.vmem %s0, %s205
        %p207 = pneg %p57
        %p208 = pneg %p54
        %p209 = pneg %p78
        %p210 = pneg %p75
        %p211 = pneg %p99
        %p212 = pneg %p96
        %p213 = pneg %p127
        %p214 = pneg %p124
        %s215 = sand.u32 %s114, 1
        %s216 = scalar_lea.sflag [#allocation3], %s215
        %s217 = sand.u32 %s114, 1
        %s218 = smul.addr %s217, 64
        %s219 = scalar_lea.vmem [#allocation2], %s218
        %p220 = pneg %p153
        %p221 = pneg %p150
        %s222 = sand.u32 %s140, 1
        %s223 = scalar_lea.sflag [#allocation5], %s222
        %s224 = sand.u32 %s140, 1
        %s225 = smul.addr %s224, 2
        %s226 = scalar_lea.vmem [#allocation4], %s225
        %s227 = smul.u32 16, %s27
        %p228 = scmp.lt.s32.totalorder %s26, 1
        %s229 = scalar_select %p228, %s26, 1
        %p230 = scmp.lt.s32.totalorder %s227, 15
        %s231 = scalar_select %p230, %s227, 15
        %s232 = smul.addr %s229, 16
        %s233 = sadd.s32 %s231, %s232
        %s234 = smul.addr %s233, 8
        %s235 = scalar_lea.vmem %s0, %s234
        %s236 = smul.u32 16, %s27
        %s237 = smul.u32 16, %s27
        %v239 = vld [vmem:[%s235] sm:$0xff]
        %v240 = vld [vmem:[%s235 + $0x8] sm:$0xff]
        %v241 = vld [vmem:[%s235 + $0x10] sm:$0xff]
        %v242 = vld [vmem:[%s235 + $0x18] sm:$0xff]
        %v243 = vld [vmem:[%s235 + $0x20] sm:$0xff]
        %v244 = vld [vmem:[%s235 + $0x28] sm:$0xff]
        %v245 = vld [vmem:[%s235 + $0x30] sm:$0xff]
        %v246 = vld [vmem:[%s235 + $0x38] sm:$0xff]
        %v247 = vld [vmem:[%s235 + $0x40] sm:$0xff]
        %v248 = vld [vmem:[%s235 + $0x48] sm:$0xff]
        %v249 = vld [vmem:[%s235 + $0x50] sm:$0xff]
        %v250 = vld [vmem:[%s235 + $0x58] sm:$0xff]
        %v251 = vld [vmem:[%s235 + $0x60] sm:$0xff]
        %v252 = vld [vmem:[%s235 + $0x68] sm:$0xff]
        %v253 = vld [vmem:[%s235 + $0x70] sm:$0xff]
        %v254 = vld [vmem:[%s235 + $0x78] sm:$0xff]
        %v255 = vpack.c.bf16 %v240, %v239
        %v256 = vpack.c.bf16 %v242, %v241
        %v257 = vpack.c.bf16 %v244, %v243
        %v258 = vpack.c.bf16 %v246, %v245
        %v259 = vpack.c.bf16 %v248, %v247
        %v260 = vpack.c.bf16 %v250, %v249
        %v261 = vpack.c.bf16 %v252, %v251
        %v262 = vpack.c.bf16 %v254, %v253
        %v263 = vld [vmem:[%s1] sm:$0x3]
        %v264 = vld [vmem:[%s2] sm:$0x1]
        %v266 = vlaneseq
        %v267 = vshrl.u32 %v266, 7
        %v268 = vsub.s32 0, %v267
        %v269 = vrot.slane %v264, %v268
        %vm271 = vcmask 31744
        %v273 = vsel %vm271, %v255, 0
        %v276 = vsel %vm271, %v256, 0
        %v279 = vsel %vm271, %v257, 0
        %v282 = vsel %vm271, %v258, 0
        %v285 = vsel %vm271, %v259, 0
        %v288 = vsel %vm271, %v260, 0
        %v291 = vsel %vm271, %v261, 0
        %v294 = vsel %vm271, %v262, 0
        %vm296 = vcmask 1041408
        %v298 = vsel %vm296, %v263, 0
        %300 = vmatprep.subr.bf16.mxu0 0
        %301 = vmatpush1.bf16.msra.mxu0 0
        %302 = vmatprep.subr.bf16.mxu0 0
        %303 = vmatpush1.bf16.msra.mxu0 0
        %304 = vmatprep.subr.bf16.mxu0 0
        %305 = vmatpush1.bf16.msra.mxu0 0
        %306 = vmatprep.subr.bf16.mxu0 0
        %307 = vmatpush1.bf16.msra.mxu0 0
        %308 = vmatprep.subr.bf16.mxu0 0
        %309 = vmatpush1.bf16.msra.mxu0 0
        %310 = vmatprep.subr.bf16.mxu0 0
        %311 = vmatpush1.bf16.msra.mxu0 0
        %312 = vmatprep.subr.bf16.mxu0 0
        %313 = vmatpush1.bf16.msra.mxu0 0
        %314 = vmatprep.subr.bf16.mxu0 0
        %315 = vmatpush1.bf16.msra.mxu0 %v298
        %316 = vmatprep.subr.bf16.mxu0 0
        %317 = vmatpush2.bf16.msra.mxu0 0
        %318 = vmatprep.subr.bf16.mxu0 0
        %319 = vmatpush2.bf16.msra.mxu0 0
        %320 = vmatprep.subr.bf16.mxu0 0
        %321 = vmatpush2.bf16.msra.mxu0 0
        %322 = vmatprep.subr.bf16.mxu0 0
        %323 = vmatpush2.bf16.msra.mxu0 0
        %324 = vmatprep.subr.bf16.mxu0 0
        %325 = vmatpush2.bf16.msra.mxu0 0
        %326 = vmatprep.subr.bf16.mxu0 0
        %327 = vmatpush2.bf16.msra.mxu0 0
        %328 = vmatprep.subr.bf16.mxu0 0
        %329 = vmatpush2.bf16.msra.mxu0 0
        %330 = vmatprep.subr.bf16.mxu0 0
        %331 = vmatpush2.bf16.msra.mxu0 0
        %332 = vmatprep.mubr.bf16.mxu0 0
        %333 = vmatmul.mubr.bf16.gmra.mxu0 %v273
        %v334 = vpop.f32.mrf.mxu0
        %v335 = vadd.f32 %v269, %v334
        %v336 = vpop.f32.mrf.mxu0
        %v337 = vpop.f32.mrf.mxu0
        %v338 = vadd.f32 %v269, %v337
        %v339 = vpop.f32.mrf.mxu0
        %340 = vmatprep.mubr.bf16.mxu0 0
        %341 = vmatmul.mubr.bf16.gmra.mxu0 %v276
        %v342 = vpop.f32.mrf.mxu0
        %v343 = vadd.f32 %v269, %v342
        %v344 = vpop.f32.mrf.mxu0
        %v345 = vpop.f32.mrf.mxu0
        %v346 = vadd.f32 %v269, %v345
        %v347 = vpop.f32.mrf.mxu0
        %348 = vmatprep.mubr.bf16.mxu0 0
        %349 = vmatmul.mubr.bf16.gmra.mxu0 %v279
        %v350 = vpop.f32.mrf.mxu0
        %v351 = vadd.f32 %v269, %v350
        %v352 = vpop.f32.mrf.mxu0
        %v353 = vpop.f32.mrf.mxu0
        %v354 = vadd.f32 %v269, %v353
        %v355 = vpop.f32.mrf.mxu0
        %356 = vmatprep.mubr.bf16.mxu0 0
        %357 = vmatmul.mubr.bf16.gmra.mxu0 %v282
        %v358 = vpop.f32.mrf.mxu0
        %v359 = vadd.f32 %v269, %v358
        %v360 = vpop.f32.mrf.mxu0
        %v361 = vpop.f32.mrf.mxu0
        %v362 = vadd.f32 %v269, %v361
        %v363 = vpop.f32.mrf.mxu0
        %364 = vmatprep.mubr.bf16.mxu0 0
        %365 = vmatmul.mubr.bf16.gmra.mxu0 %v285
        %v366 = vpop.f32.mrf.mxu0
        %v367 = vadd.f32 %v269, %v366
        %v368 = vpop.f32.mrf.mxu0
        %v369 = vpop.f32.mrf.mxu0
        %v370 = vadd.f32 %v269, %v369
        %v371 = vpop.f32.mrf.mxu0
        %372 = vmatprep.mubr.bf16.mxu0 0
        %373 = vmatmul.mubr.bf16.gmra.mxu0 %v288
        %v374 = vpop.f32.mrf.mxu0
        %v375 = vadd.f32 %v269, %v374
        %v376 = vpop.f32.mrf.mxu0
        %v377 = vpop.f32.mrf.mxu0
        %v378 = vadd.f32 %v269, %v377
        %v379 = vpop.f32.mrf.mxu0
        %380 = vmatprep.mubr.bf16.mxu0 0
        %381 = vmatmul.mubr.bf16.gmra.mxu0 %v291
        %v382 = vpop.f32.mrf.mxu0
        %v383 = vadd.f32 %v269, %v382
        %v384 = vpop.f32.mrf.mxu0
        %v385 = vpop.f32.mrf.mxu0
        %v386 = vadd.f32 %v269, %v385
        %v387 = vpop.f32.mrf.mxu0
        %388 = vmatprep.mubr.bf16.mxu0 0
        %389 = vmatmul.mubr.bf16.gmra.mxu0 %v294
        %v390 = vpop.f32.mrf.mxu0
        %v391 = vadd.f32 %v269, %v390
        %v392 = vpop.f32.mrf.mxu0
        %v393 = vpop.f32.mrf.mxu0
        %v394 = vadd.f32 %v269, %v393
        %v395 = vpop.f32.mrf.mxu0
        %396 = vdwg.mxu0
        %v397 = vpack.c.bf16 %v338, %v335
        %v398 = vpack.c.bf16 %v346, %v343
        %v399 = vpack.c.bf16 %v354, %v351
        %v400 = vpack.c.bf16 %v362, %v359
        %v401 = vpack.c.bf16 %v370, %v367
        %v402 = vpack.c.bf16 %v378, %v375
        %v403 = vpack.c.bf16 %v386, %v383
        %v404 = vpack.c.bf16 %v394, %v391
        %v413 = vunpack.c.l.b16 %v397
        %v414 = vunpack.c.h.b16 %v397
        %v415 = vunpack.c.l.b16 %v398
        %v416 = vunpack.c.h.b16 %v398
        %v417 = vunpack.c.l.b16 %v399
        %v418 = vunpack.c.h.b16 %v399
        %v419 = vunpack.c.l.b16 %v400
        %v420 = vunpack.c.h.b16 %v400
        %v421 = vunpack.c.l.b16 %v401
        %v422 = vunpack.c.h.b16 %v401
        %v423 = vunpack.c.l.b16 %v402
        %v424 = vunpack.c.h.b16 %v402
        %v425 = vunpack.c.l.b16 %v403
        %v426 = vunpack.c.h.b16 %v403
        %v427 = vunpack.c.l.b16 %v404
        %v428 = vunpack.c.h.b16 %v404
        %v429 = vpack.c.b16 %v413, %v413
        %v430 = vpack.c.b16 %v414, %v414
        %v431 = vpack.c.b16 %v415, %v415
        %v432 = vpack.c.b16 %v416, %v416
        %v433 = vpack.c.b16 %v417, %v417
        %v434 = vpack.c.b16 %v418, %v418
        %v435 = vpack.c.b16 %v419, %v419
        %v436 = vpack.c.b16 %v420, %v420
        %v437 = vpack.c.b16 %v421, %v421
        %v438 = vpack.c.b16 %v422, %v422
        %v439 = vpack.c.b16 %v423, %v423
        %v440 = vpack.c.b16 %v424, %v424
        %v441 = vpack.c.b16 %v425, %v425
        %v442 = vpack.c.b16 %v426, %v426
        %v443 = vpack.c.b16 %v427, %v427
        %v444 = vpack.c.b16 %v428, %v428
        %461 = vst [vmem:[%s219] sm:$0xf] %v429
        %462 = vst [vmem:[%s219 + $0x4] sm:$0xf] %v430
        %463 = vst [vmem:[%s219 + $0x8] sm:$0xf] %v431
        %464 = vst [vmem:[%s219 + $0xc] sm:$0xf] %v432
        %465 = vst [vmem:[%s219 + $0x10] sm:$0xf] %v433
        %466 = vst [vmem:[%s219 + $0x14] sm:$0xf] %v434
        %467 = vst [vmem:[%s219 + $0x18] sm:$0xf] %v435
        %468 = vst [vmem:[%s219 + $0x1c] sm:$0xf] %v436
        %469 = vst [vmem:[%s219 + $0x20] sm:$0xf] %v437
        %470 = vst [vmem:[%s219 + $0x24] sm:$0xf] %v438
        %471 = vst [vmem:[%s219 + $0x28] sm:$0xf] %v439
        %472 = vst [vmem:[%s219 + $0x2c] sm:$0xf] %v440
        %473 = vst [vmem:[%s219 + $0x30] sm:$0xf] %v441
        %474 = vst [vmem:[%s219 + $0x34] sm:$0xf] %v442
        %475 = vst [vmem:[%s219 + $0x38] sm:$0xf] %v443
        %476 = vst [vmem:[%s219 + $0x3c] sm:$0xf] %v444
        %p477 = scmp.eq.s32.totalorder %s27, 0
        // Predicated region
        $region33: #{tpu_custom_call.1} parent=31 // pred_check
          %p478 = pneg %p477
        $region34: #{tpu_custom_call.1} parent=31 // pred_check_branch
          %480 = sbr.rel (%p478) target = $region36
        $region35: #{tpu_custom_call.1} parent=31 // pred_region
          %481 = vst [vmem:[%s226] sm:$0x3] 0.0
        $region36: #{tpu_custom_call.1} parent=31 // pred_fallthru
          _
        %v482 = vlaneseq
        %v483 = vshrl.u32 %v482, 7
        %v484 = vadd.s32 %v483, 8
        %v485 = vadd.s32 %v483, 16
        %v486 = vadd.s32 %v483, 24
        %v487 = vadd.s32 %v483, 32
        %v488 = vadd.s32 %v483, 40
        %v489 = vadd.s32 %v483, 48
        %v490 = vadd.s32 %v483, 56
        %v491 = vadd.s32 %v483, 64
        %v492 = vadd.s32 %v483, 72
        %v493 = vadd.s32 %v483, 80
        %v494 = vadd.s32 %v483, 88
        %v495 = vadd.s32 %v483, 96
        %v496 = vadd.s32 %v483, 104
        %v497 = vadd.s32 %v483, 112
        %v498 = vadd.s32 %v483, 120
        %s499 = smul.u32 %s27, 128
        %v500 = vstv %s499
        %v501 = vadd.s32 %v483, %v500
        %v502 = vadd.s32 %v484, %v500
        %v503 = vadd.s32 %v485, %v500
        %v504 = vadd.s32 %v486, %v500
        %v505 = vadd.s32 %v487, %v500
        %v506 = vadd.s32 %v488, %v500
        %v507 = vadd.s32 %v489, %v500
        %v508 = vadd.s32 %v490, %v500
        %v509 = vadd.s32 %v491, %v500
        %v510 = vadd.s32 %v492, %v500
        %v511 = vadd.s32 %v493, %v500
        %v512 = vadd.s32 %v494, %v500
        %v513 = vadd.s32 %v495, %v500
        %v514 = vadd.s32 %v496, %v500
        %v515 = vadd.s32 %v497, %v500
        %v516 = vadd.s32 %v498, %v500
        %vm517 = vcmp.lt.s32.totalorder %v501, 128
        %vm518 = vcmp.lt.s32.totalorder %v502, 128
        %vm519 = vcmp.lt.s32.totalorder %v503, 128
        %vm520 = vcmp.lt.s32.totalorder %v504, 128
        %vm521 = vcmp.lt.s32.totalorder %v505, 128
        %vm522 = vcmp.lt.s32.totalorder %v506, 128
        %vm523 = vcmp.lt.s32.totalorder %v507, 128
        %vm524 = vcmp.lt.s32.totalorder %v508, 128
        %vm525 = vcmp.lt.s32.totalorder %v509, 128
        %vm526 = vcmp.lt.s32.totalorder %v510, 128
        %vm527 = vcmp.lt.s32.totalorder %v511, 128
        %vm528 = vcmp.lt.s32.totalorder %v512, 128
        %vm529 = vcmp.lt.s32.totalorder %v513, 128
        %vm530 = vcmp.lt.s32.totalorder %v514, 128
        %vm531 = vcmp.lt.s32.totalorder %v515, 128
        %vm532 = vcmp.lt.s32.totalorder %v516, 128
        %v533 = vsel %vm517, 1, 0
        %v534 = vsel %vm518, 1, 0
        %v535 = vsel %vm519, 1, 0
        %v536 = vsel %vm520, 1, 0
        %v537 = vsel %vm521, 1, 0
        %v538 = vsel %vm522, 1, 0
        %v539 = vsel %vm523, 1, 0
        %v540 = vsel %vm524, 1, 0
        %v541 = vsel %vm525, 1, 0
        %v542 = vsel %vm526, 1, 0
        %v543 = vsel %vm527, 1, 0
        %v544 = vsel %vm528, 1, 0
        %v545 = vsel %vm529, 1, 0
        %v546 = vsel %vm530, 1, 0
        %v547 = vsel %vm531, 1, 0
        %v548 = vsel %vm532, 1, 0
        %vm549 = vcmp.eq.s32.totalorder %v533, 1
        %vm550 = vcmp.eq.s32.totalorder %v534, 1
        %vm551 = vcmp.eq.s32.totalorder %v535, 1
        %vm552 = vcmp.eq.s32.totalorder %v536, 1
        %vm553 = vcmp.eq.s32.totalorder %v537, 1
        %vm554 = vcmp.eq.s32.totalorder %v538, 1
        %vm555 = vcmp.eq.s32.totalorder %v539, 1
        %vm556 = vcmp.eq.s32.totalorder %v540, 1
        %vm557 = vcmp.eq.s32.totalorder %v541, 1
        %vm558 = vcmp.eq.s32.totalorder %v542, 1
        %vm559 = vcmp.eq.s32.totalorder %v543, 1
        %vm560 = vcmp.eq.s32.totalorder %v544, 1
        %vm561 = vcmp.eq.s32.totalorder %v545, 1
        %vm562 = vcmp.eq.s32.totalorder %v546, 1
        %vm563 = vcmp.eq.s32.totalorder %v547, 1
        %vm564 = vcmp.eq.s32.totalorder %v548, 1
        %v565 = vsel %vm549, %v335, 0.0
        %v566 = vsel %vm550, %v338, 0.0
        %v567 = vsel %vm551, %v343, 0.0
        %v568 = vsel %vm552, %v346, 0.0
        %v569 = vsel %vm553, %v351, 0.0
        %v570 = vsel %vm554, %v354, 0.0
        %v571 = vsel %vm555, %v359, 0.0
        %v572 = vsel %vm556, %v362, 0.0
        %v573 = vsel %vm557, %v367, 0.0
        %v574 = vsel %vm558, %v370, 0.0
        %v575 = vsel %vm559, %v375, 0.0
        %v576 = vsel %vm560, %v378, 0.0
        %v577 = vsel %vm561, %v383, 0.0
        %v578 = vsel %vm562, %v386, 0.0
        %v579 = vsel %vm563, %v391, 0.0
        %v580 = vsel %vm564, %v394, 0.0
        %v581 = vadd.f32 %v565, %v566
        %v582 = vadd.f32 %v581, %v567
        %v583 = vadd.f32 %v582, %v568
        %v584 = vadd.f32 %v583, %v569
        %v585 = vadd.f32 %v584, %v570
        %v586 = vadd.f32 %v585, %v571
        %v587 = vadd.f32 %v586, %v572
        %v588 = vadd.f32 %v587, %v573
        %v589 = vadd.f32 %v588, %v574
        %v590 = vadd.f32 %v589, %v575
        %v591 = vadd.f32 %v590, %v576
        %v592 = vadd.f32 %v591, %v577
        %v593 = vadd.f32 %v592, %v578
        %v594 = vadd.f32 %v593, %v579
        %v595 = vadd.f32 %v594, %v580
        %v596 = vrot.slane %v595, 4
        %v597 = vadd.f32 %v595, %v596
        %v598 = vrot.slane %v597, 2
        %v599 = vadd.f32 %v597, %v598
        %v600 = vrot.slane %v599, 1
        %v601 = vadd.f32 %v599, %v600
        %v602 = vmul.f32 %v565, %v565
        %v603 = vmul.f32 %v566, %v566
        %v604 = vmul.f32 %v567, %v567
        %v605 = vmul.f32 %v568, %v568
        %v606 = vmul.f32 %v569, %v569
        %v607 = vmul.f32 %v570, %v570
        %v608 = vmul.f32 %v571, %v571
        %v609 = vmul.f32 %v572, %v572
        %v610 = vmul.f32 %v573, %v573
        %v611 = vmul.f32 %v574, %v574
        %v612 = vmul.f32 %v575, %v575
        %v613 = vmul.f32 %v576, %v576
        %v614 = vmul.f32 %v577, %v577
        %v615 = vmul.f32 %v578, %v578
        %v616 = vmul.f32 %v579, %v579
        %v617 = vmul.f32 %v580, %v580
        %v618 = vadd.f32 %v602, %v603
        %v619 = vadd.f32 %v618, %v604
        %v620 = vadd.f32 %v619, %v605
        %v621 = vadd.f32 %v620, %v606
        %v622 = vadd.f32 %v621, %v607
        %v623 = vadd.f32 %v622, %v608
        %v624 = vadd.f32 %v623, %v609
        %v625 = vadd.f32 %v624, %v610
        %v626 = vadd.f32 %v625, %v611
        %v627 = vadd.f32 %v626, %v612
        %v628 = vadd.f32 %v627, %v613
        %v629 = vadd.f32 %v628, %v614
        %v630 = vadd.f32 %v629, %v615
        %v631 = vadd.f32 %v630, %v616
        %v632 = vadd.f32 %v631, %v617
        %v633 = vrot.slane %v632, 4
        %v634 = vadd.f32 %v632, %v633
        %v635 = vrot.slane %v634, 2
        %v636 = vadd.f32 %v634, %v635
        %v637 = vrot.slane %v636, 1
        %v638 = vadd.f32 %v636, %v637
        %vm639 = vcmask 1040384
        %v640 = vsel %vm639, %v601, %v638
        %v641 = vld [vmem:[%s226] sm:$0x3]
        %v642 = vadd.f32 %v641, %v640
        %643 = vst [vmem:[%s226] sm:$0x3] %v642
        %s644 = sand.u32 %s114, 1
        %s645 = scalar_lea.sflag [#allocation3], %s644
        %s646 = sand.u32 %s114, 1
        %s647 = smul.addr %s646, 64
        %s648 = scalar_lea.vmem [#allocation2], %s647
        %s649 = sand.u32 %s140, 1
        %s650 = scalar_lea.sflag [#allocation5], %s649
        %s651 = sand.u32 %s140, 1
        %s652 = smul.addr %s651, 2
        %s653 = scalar_lea.vmem [#allocation4], %s652
        // Predicated region
        $region37: #{tpu_custom_call.1} parent=31 // pred_check
          %p654 = pneg %p124
        $region38: #{tpu_custom_call.1} parent=31 // pred_check_branch
          %656 = sbr.rel (%p654) target = $region40
        $region39: #{tpu_custom_call.1} parent=31 // pred_region
          %s657 = smul.u32 16, %s27
          %s659 = ssub.s32 1024, 1024
          %660 = vsyncadd %s645, %s659
          %s661 = smul.addr %s26, 16
          %s662 = sadd.s32 %s657, %s661
          %s663 = smul.addr %s662, 64
          %s664 = scalar_lea.hbm %s3, %s663
          %s665 = sshll.u32 %s648, 4
          %s666 = int_to_ptr.vmem [resolvable:$true] %s665
          %671 = dma.vmem_to_hbm [thread:$0]  %s666, 1024, %s664, %s645, 64, 64, 4
        $region40: #{tpu_custom_call.1} parent=31 // pred_fallthru
          _
        // Predicated region
        $region41: #{tpu_custom_call.1} parent=31 // pred_check
          %p672 = pneg %p150
        $region42: #{tpu_custom_call.1} parent=31 // pred_check_branch
          %674 = sbr.rel (%p672) target = $region44
        $region43: #{tpu_custom_call.1} parent=31 // pred_region
          %s676 = ssub.s32 32, 32
          %677 = vsyncadd %s650, %s676
          %s678 = smul.addr %s26, 32
          %s679 = scalar_lea.hbm %s4, %s678
          %s681 = sshll.u32 %s653, 4
          %s682 = int_to_ptr.vmem [resolvable:$true] %s681
          %684 = dma.vmem_to_hbm [thread:$0]  %s682, 32, %s679, %s650
        $region44: #{tpu_custom_call.1} parent=31 // pred_fallthru
          _
      $region32: #{tpu_custom_call.1} parent=5 // pred_fallthru
        _
      %p685 = scmp.le.s32.totalorder 2, %s17
      // Predicated region
      $region45: #{tpu_custom_call.1} parent=5 // pred_check
        %p686 = pneg %p685
      $region46: #{tpu_custom_call.1} parent=5 // pred_check_branch
        %688 = sbr.rel (%p686) target = $region48
      $region47: #{tpu_custom_call.1} parent=5 // pred_region
        %s689 = ssub.s32 %s17, 2
        // Predicated region
        $region49: #{tpu_custom_call.1} parent=47 // pred_check
          %p690 = pneg %p130
        $region50: #{tpu_custom_call.1} parent=47 // pred_check_branch
          %692 = sbr.rel (%p690) target = $region52
        $region51: #{tpu_custom_call.1} parent=47 // pred_region
          %s693 = sand.u32 %s115, 1
          %s694 = scalar_lea.sflag [#allocation3], %s693
          %s695 = sand.u32 %s115, 1
          %s696 = smul.addr %s695, 64
          %s697 = scalar_lea.vmem [#allocation2], %s696
          %698 = dma.done %s694, 1024
        $region52: #{tpu_custom_call.1} parent=47 // pred_fallthru
          _
        // Predicated region
        $region53: #{tpu_custom_call.1} parent=47 // pred_check
          %p699 = pneg %p156
        $region54: #{tpu_custom_call.1} parent=47 // pred_check_branch
          %701 = sbr.rel (%p699) target = $region56
        $region55: #{tpu_custom_call.1} parent=47 // pred_region
          %s702 = sand.u32 %s141, 1
          %s703 = scalar_lea.sflag [#allocation5], %s702
          %s704 = sand.u32 %s141, 1
          %s705 = smul.addr %s704, 2
          %s706 = scalar_lea.vmem [#allocation4], %s705
          %707 = dma.done %s703, 32
        $region56: #{tpu_custom_call.1} parent=47 // pred_fallthru
          _
      $region48: #{tpu_custom_call.1} parent=5 // pred_fallthru
        _
    $region6: #{tpu_custom_call.1} parent=1 // loop_footer
      %s21 = sadd.s32 1, %s17
    $region7: #{tpu_custom_call.1} parent=1 // loop_footer_branch
      %16 = sbr.rel target = $region3
    $region8: #{tpu_custom_call.1} parent=1 // loop_exit
      _
    %708 = vsyncpa [#allocation3], 1
    %s709 = scalar_lea.sflag [#allocation3], 1
    %710 = vsyncpa %s709, 1
    %711 = vsyncpa [#allocation5], 1
    %s712 = scalar_lea.sflag [#allocation5], 1
    %713 = vsyncpa %s712, 1

</llo_original>
